<compile_context>
chip_gen: v7x
topology: tpu7x:2x2x1
jax: 0.10.0
libtpu: 0.0.40
codegen_flags: <defaults>
</compile_context>

<pallas_src>
import jax
import jax.numpy as jnp
from jax import lax
from jax.experimental import pallas as pl
from jax.experimental.pallas import tpu as pltpu


# --------------------------------------------------------------------------- #
# tiling helpers
# --------------------------------------------------------------------------- #
def _round_up(a, b):
    return -(-a // b) * b


def _vmem_capacity_bytes():
    """Per-core VMEM capacity; conservative v7x fallback if query unavailable."""
    try:
        info = pltpu.get_tpu_info()
        cap = getattr(info, "vmem_capacity_bytes", None)
        if cap:
            return int(cap)
    except Exception:
        pass
    return 64 * 1024 * 1024          # v7x per-TensorCore VMEM (smallest gen)


def _vmem_limit_bytes():
    return int(min(_vmem_capacity_bytes() * 0.65, 96 * 1024 * 1024))


def _choose_tile(B, C, itemsize, reduction, tile_samples):
    """Returns (TB, TBR, Bp, R, num_tiles).

    Samples are packed (sample -> (row, lane) = (s // 128, s % 128)); a tile is
    TBR sublane-rows x 128 lanes = TB samples.  TBR respects sublane packing of
    the logits dtype (8 for f32, 16 for bf16, 32 for 8-bit).
    """
    tbr_mult = 8 * max(1, 4 // int(itemsize))
    Bp = _round_up(B, 128)
    R = Bp // 128

    if tile_samples is not None:
        tb = int(tile_samples)
    else:
        limit = _vmem_limit_bytes()
        # double-buffered streams per sample + f32 body temporaries per sample
        stream = 2 * (C * itemsize + 4 + (8 if reduction == "none" else 0))
        temps = 48
        tb = (limit // 2) // (stream + temps)
        tb = min(tb, 1 << 18)        # keep per-step working set / code size sane

    tbr = (tb // 128 // tbr_mult) * tbr_mult
    if tbr <= 0 or tbr >= R:
        return Bp, R, Bp, R, 1       # single full-extent tile
    num_tiles = -(-R // tbr)
    return tbr * 128, tbr, Bp, R, num_tiles


# --------------------------------------------------------------------------- #
# kernel
# --------------------------------------------------------------------------- #
def _make_kernel(B, C, TB, TBR, reduction, need_mask):
    unroll = C <= 64                 # real CubeLoss case: C == 4

    def kernel(x_ref, t_ref, loss_ref, acc_ref):
        i = pl.program_id(0)
        t = t_ref[...]                                     # (TBR, 128) int32

        if unroll:
            # pass 1: per-sample max over classes (VPU, fully dense vregs)
            m = x_ref[0].astype(jnp.float32)               # (TBR, 128)
            for c in range(1, C):
                m = jnp.maximum(m, x_ref[c].astype(jnp.float32))
            # pass 2 (descending c): sum-exp, target gather, first-max argmax
            se = jnp.zeros_like(m)
            logit_t = jnp.zeros_like(m)
            pred = jnp.zeros(m.shape, jnp.int32)
            for c in range(C - 1, -1, -1):
                xc = x_ref[c].astype(jnp.float32)
                se = se + jnp.exp(xc - m)
                logit_t = logit_t + jnp.where(t == c, xc, 0.0)
                pred = jnp.where(xc == m, jnp.int32(c), pred)
        else:
            x = x_ref[...].astype(jnp.float32)             # (C, TBR, 128)
            cidx = lax.broadcasted_iota(jnp.int32, x.shape, 0)
            m = jnp.max(x, axis=0)
            se = jnp.sum(jnp.exp(x - m[None]), axis=0)
            logit_t = jnp.sum(jnp.where(cidx == t[None], x, 0.0), axis=0)
            pred = jnp.min(jnp.where(x == m[None], cidx, jnp.int32(C)), axis=0)

        loss_i = jnp.log(se) + m - logit_t                 # (TBR, 128)
        acc_i = (pred == t).astype(jnp.float32)

        if reduction == "none":
            loss_ref[...] = loss_i                         # lane-dense slabs
            acc_ref[...] = acc_i
        else:
            if need_mask:
                r = lax.broadcasted_iota(jnp.int32, (TBR, 128), 0)
                l = lax.broadcasted_iota(jnp.int32, (TBR, 128), 1)
                valid = (i * TB + r * 128 + l) < B
                loss_i = jnp.where(valid, loss_i, 0.0)     # select: OOB-safe
                acc_i = jnp.where(valid, acc_i, 0.0)
            # per-tile lane-wise partial sums; final tiny reduce in wrapper
            loss_ref[...] = jnp.sum(loss_i, axis=0, keepdims=True)  # (1, 128)
            acc_ref[...] = jnp.sum(acc_i, axis=0, keepdims=True)

    return kernel


# --------------------------------------------------------------------------- #
# wrapper
# --------------------------------------------------------------------------- #
def cube_loss(output, target, reduction="mean", tile_samples=None):
    """Pallas equivalent of CubeLoss.forward.

    output: (B, ...) float logits (any float dtype), flattened to (B, C)
    target: (B, 2) int; class = 2*target[:,0] + target[:,1]
    Returns (loss, acc) with the same reduction semantics as the PyTorch module.
    """
    assert reduction in ("none", "mean", "sum")
    B = output.shape[0]
    x = jnp.reshape(output, (B, -1))                    # keep original dtype
    C = x.shape[1]
    t = (2 * target[:, 0] + target[:, 1]).astype(jnp.int32)   # fused wrapper-side

    itemsize = jnp.dtype(x.dtype).itemsize
    TB, TBR, Bp, R, num_tiles = _choose_tile(B, C, itemsize, reduction, tile_samples)
    need_mask = (reduction != "none") and (num_tiles * TB != B)

    # lane-dense layouts: classes on the leading (non-vreg) axis, 128 samples/lane-row
    xt = jnp.pad(x.T, ((0, 0), (0, Bp - B))).reshape(C, R, 128)
    tt = jnp.pad(t, (0, Bp - B)).reshape(R, 128)

    if reduction == "none":
        out_shape = (jax.ShapeDtypeStruct((R, 128), jnp.float32),
                     jax.ShapeDtypeStruct((R, 128), jnp.float32))
        out_specs = [pl.BlockSpec((TBR, 128), lambda i: (i, 0)),
                     pl.BlockSpec((TBR, 128), lambda i: (i, 0))]
    else:
        out_shape = (jax.ShapeDtypeStruct((1, 128 * num_tiles), jnp.float32),
                     jax.ShapeDtypeStruct((1, 128 * num_tiles), jnp.float32))
        out_specs = [pl.BlockSpec((1, 128), lambda i: (0, i)),
                     pl.BlockSpec((1, 128), lambda i: (0, i))]

    kernel = _make_kernel(B, C, TB, TBR, reduction, need_mask)

    loss_o, acc_o = pl.pallas_call(
        kernel,
        out_shape=out_shape,
        grid_spec=pltpu.PrefetchScalarGridSpec(
            num_scalar_prefetch=0,
            grid=(num_tiles,),
            in_specs=[
                pl.BlockSpec((C, TBR, 128), lambda i: (0, i, 0)),  # logits, orig dtype
                pl.BlockSpec((TBR, 128), lambda i: (i, 0)),        # fused class idx
            ],
            out_specs=out_specs,
        ),
        compiler_params=pltpu.CompilerParams(
            dimension_semantics=("parallel",),      # no cross-tile dependence
            vmem_limit_bytes=_vmem_limit_bytes(),
        ),
    )(xt, tt)

    if reduction == "none":
        return loss_o.reshape(Bp)[:B], acc_o.reshape(Bp)[:B]
    loss = jnp.sum(loss_o)
    acc = jnp.sum(acc_o)
    if reduction == "mean":
        loss = loss / B
        acc = acc / B
    return loss, acc


# --------------------------------------------------------------------------- #
# pure-JAX reference + tests
# --------------------------------------------------------------------------- #
def cube_loss_ref(output, target, reduction="mean"):
    B = output.shape[0]
    x = jnp.reshape(output, (B, -1)).astype(jnp.float32)
    t = (2 * target[:, 0] + target[:, 1]).astype(jnp.int32)
    logp = jax.nn.log_softmax(x, axis=1)
    loss_i = -jnp.take_along_axis(logp, t[:, None], axis=1)[:, 0]
    pred = jnp.argmax(x, axis=1)
    acc_i = (pred == t).astype(jnp.float32)
    if reduction == "mean":
        return jnp.mean(loss_i), jnp.mean(acc_i)
    if reduction == "sum":
        return jnp.sum(loss_i), jnp.sum(acc_i)
    return loss_i, acc_i


def _check(got, ref, tag, atol, rtol):
    assert jnp.allclose(got[0], ref[0], atol=atol, rtol=rtol), (tag, got[0], ref[0])
    assert jnp.allclose(got[1], ref[1], atol=atol, rtol=rtol), (tag, got[1], ref[1])


if __name__ == "__main__":
    key = jax.random.PRNGKey(0)
    k1, k2, k3, k4, k5, k6 = jax.random.split(key, 6)

    # Case 1: tiny f32 case matching the module's implied shapes (B, 2, 2) -> C=4.
    B1 = 8
    out1 = jax.random.normal(k1, (B1, 2, 2), dtype=jnp.float32)
    tgt1 = jax.random.randint(k2, (B1, 2), 0, 2, dtype=jnp.int32)
    got = jax.block_until_ready(cube_loss(out1, tgt1, reduction="mean"))
    _check(got, cube_loss_ref(out1, tgt1, "mean"), "c1-mean", 1e-5, 1e-5)

    # Case 2: bf16 logits (dtype passthrough), B=20 -> padded to 128 lanes,
    # single tile, all three reduction modes.
    B2 = 20
    out2 = jax.random.normal(k3, (B2, 2, 2), dtype=jnp.float32).astype(jnp.bfloat16)
    tgt2 = jax.random.randint(k4, (B2, 2), 0, 2, dtype=jnp.int32)
    for red in ("mean", "sum", "none"):
        got = jax.block_until_ready(cube_loss(out2, tgt2, reduction=red))
        _check(got, cube_loss_ref(out2, tgt2, red), f"c2-{red}", 1e-4, 1e-4)

    # Case 3: multi-tile grid with a ragged last tile and in-kernel masking
    # (B=5000, tile of 2048 samples -> 3 tiles), all reduction modes.
    B3 = 5000
    out3 = jax.random.normal(k5, (B3, 2, 2), dtype=jnp.float32)
    tgt3 = jax.random.randint(k6, (B3, 2), 0, 2, dtype=jnp.int32)
    for red in ("mean", "sum", "none"):
        got = jax.block_until_ready(
            cube_loss(out3, tgt3, reduction=red, tile_samples=2048))
        _check(got, cube_loss_ref(out3, tgt3, red), f"c3-{red}", 1e-3, 1e-4)

    print("KERNEL_OK")
</pallas_src>

<mosaic_0001>
module attributes {stable_mosaic.version = 11 : i64} {
  func.func @kernel(%arg0: i32, %arg1: memref<4x1x128xf32, #tpu.memory_space<vmem>>, %arg2: memref<1x128xi32, #tpu.memory_space<vmem>>, %arg3: memref<1x128xf32, #tpu.memory_space<vmem>>, %arg4: memref<1x128xf32, #tpu.memory_space<vmem>>) attributes {dimension_semantics = [#tpu.dimension_semantics<parallel>], iteration_bounds = array<i64: 1>, scalar_prefetch = 0 : i64, scratch_operands = 0 : i64, tpu.core_type = #tpu.core_type<tc>, window_params = [{transform_indices = @transform_0, window_bounds = array<i64: 4, 1, 128>}, {transform_indices = @transform_1, window_bounds = array<i64: 1, 128>}, {transform_indices = @transform_2, window_bounds = array<i64: 1, 128>}, {transform_indices = @transform_3, window_bounds = array<i64: 1, 128>}]} {
    %c0 = arith.constant 0 : index
    %c0_0 = arith.constant 0 : index
    %0 = vector.load %arg2[%c0, %c0_0] : memref<1x128xi32, #tpu.memory_space<vmem>>, vector<1x128xi32>
    %c0_1 = arith.constant 0 : index
    %c0_2 = arith.constant 0 : index
    %c0_3 = arith.constant 0 : index
    %1 = vector.load %arg1[%c0_1, %c0_2, %c0_3] : memref<4x1x128xf32, #tpu.memory_space<vmem>>, vector<1x1x128xf32>
    %2 = vector.shape_cast %1 : vector<1x1x128xf32> to vector<1x128xf32>
    %c1 = arith.constant 1 : index
    %c0_4 = arith.constant 0 : index
    %c0_5 = arith.constant 0 : index
    %3 = vector.load %arg1[%c1, %c0_4, %c0_5] : memref<4x1x128xf32, #tpu.memory_space<vmem>>, vector<1x1x128xf32>
    %4 = vector.shape_cast %3 : vector<1x1x128xf32> to vector<1x128xf32>
    %5 = arith.maximumf %2, %4 : vector<1x128xf32>
    %c2 = arith.constant 2 : index
    %c0_6 = arith.constant 0 : index
    %c0_7 = arith.constant 0 : index
    %6 = vector.load %arg1[%c2, %c0_6, %c0_7] : memref<4x1x128xf32, #tpu.memory_space<vmem>>, vector<1x1x128xf32>
    %7 = vector.shape_cast %6 : vector<1x1x128xf32> to vector<1x128xf32>
    %8 = arith.maximumf %5, %7 : vector<1x128xf32>
    %c3 = arith.constant 3 : index
    %c0_8 = arith.constant 0 : index
    %c0_9 = arith.constant 0 : index
    %9 = vector.load %arg1[%c3, %c0_8, %c0_9] : memref<4x1x128xf32, #tpu.memory_space<vmem>>, vector<1x1x128xf32>
    %10 = vector.shape_cast %9 : vector<1x1x128xf32> to vector<1x128xf32>
    %11 = arith.maximumf %8, %10 : vector<1x128xf32>
    %cst = arith.constant 0.000000e+00 : f32
    %12 = vector.broadcast %cst : f32 to vector<1x128xf32>
    %cst_10 = arith.constant 0.000000e+00 : f32
    %13 = vector.broadcast %cst_10 : f32 to vector<1x128xf32>
    %c0_i32 = arith.constant 0 : i32
    %14 = vector.broadcast %c0_i32 : i32 to vector<1x128xi32>
    %c3_11 = arith.constant 3 : index
    %c0_12 = arith.constant 0 : index
    %c0_13 = arith.constant 0 : index
    %15 = vector.load %arg1[%c3_11, %c0_12, %c0_13] : memref<4x1x128xf32, #tpu.memory_space<vmem>>, vector<1x1x128xf32>
    %16 = vector.shape_cast %15 : vector<1x1x128xf32> to vector<1x128xf32>
    %17 = arith.subf %16, %11 : vector<1x128xf32>
    %18 = math.exp %17 : vector<1x128xf32>
    %19 = arith.addf %12, %18 : vector<1x128xf32>
    %c3_i32 = arith.constant 3 : i32
    %20 = vector.broadcast %c3_i32 : i32 to vector<1x128xi32>
    %21 = arith.cmpi eq, %0, %20 : vector<1x128xi32>
    %cst_14 = arith.constant 0.000000e+00 : f32
    %22 = vector.broadcast %cst_14 : f32 to vector<1x128xf32>
    %23 = arith.select %21, %16, %22 : vector<1x128xi1>, vector<1x128xf32>
    %24 = arith.addf %13, %23 : vector<1x128xf32>
    %25 = arith.cmpf oeq, %16, %11 : vector<1x128xf32>
    %c3_i32_15 = arith.constant 3 : i32
    %26 = vector.broadcast %c3_i32_15 : i32 to vector<1x128xi32>
    %27 = arith.select %25, %26, %14 : vector<1x128xi1>, vector<1x128xi32>
    %c2_16 = arith.constant 2 : index
    %c0_17 = arith.constant 0 : index
    %c0_18 = arith.constant 0 : index
    %28 = vector.load %arg1[%c2_16, %c0_17, %c0_18] : memref<4x1x128xf32, #tpu.memory_space<vmem>>, vector<1x1x128xf32>
    %29 = vector.shape_cast %28 : vector<1x1x128xf32> to vector<1x128xf32>
    %30 = arith.subf %29, %11 : vector<1x128xf32>
    %31 = math.exp %30 : vector<1x128xf32>
    %32 = arith.addf %19, %31 : vector<1x128xf32>
    %c2_i32 = arith.constant 2 : i32
    %33 = vector.broadcast %c2_i32 : i32 to vector<1x128xi32>
    %34 = arith.cmpi eq, %0, %33 : vector<1x128xi32>
    %cst_19 = arith.constant 0.000000e+00 : f32
    %35 = vector.broadcast %cst_19 : f32 to vector<1x128xf32>
    %36 = arith.select %34, %29, %35 : vector<1x128xi1>, vector<1x128xf32>
    %37 = arith.addf %24, %36 : vector<1x128xf32>
    %38 = arith.cmpf oeq, %29, %11 : vector<1x128xf32>
    %c2_i32_20 = arith.constant 2 : i32
    %39 = vector.broadcast %c2_i32_20 : i32 to vector<1x128xi32>
    %40 = arith.select %38, %39, %27 : vector<1x128xi1>, vector<1x128xi32>
    %c1_21 = arith.constant 1 : index
    %c0_22 = arith.constant 0 : index
    %c0_23 = arith.constant 0 : index
    %41 = vector.load %arg1[%c1_21, %c0_22, %c0_23] : memref<4x1x128xf32, #tpu.memory_space<vmem>>, vector<1x1x128xf32>
    %42 = vector.shape_cast %41 : vector<1x1x128xf32> to vector<1x128xf32>
    %43 = arith.subf %42, %11 : vector<1x128xf32>
    %44 = math.exp %43 : vector<1x128xf32>
    %45 = arith.addf %32, %44 : vector<1x128xf32>
    %c1_i32 = arith.constant 1 : i32
    %46 = vector.broadcast %c1_i32 : i32 to vector<1x128xi32>
    %47 = arith.cmpi eq, %0, %46 : vector<1x128xi32>
    %cst_24 = arith.constant 0.000000e+00 : f32
    %48 = vector.broadcast %cst_24 : f32 to vector<1x128xf32>
    %49 = arith.select %47, %42, %48 : vector<1x128xi1>, vector<1x128xf32>
    %50 = arith.addf %37, %49 : vector<1x128xf32>
    %51 = arith.cmpf oeq, %42, %11 : vector<1x128xf32>
    %c1_i32_25 = arith.constant 1 : i32
    %52 = vector.broadcast %c1_i32_25 : i32 to vector<1x128xi32>
    %53 = arith.select %51, %52, %40 : vector<1x128xi1>, vector<1x128xi32>
    %c0_26 = arith.constant 0 : index
    %c0_27 = arith.constant 0 : index
    %c0_28 = arith.constant 0 : index
    %54 = vector.load %arg1[%c0_26, %c0_27, %c0_28] : memref<4x1x128xf32, #tpu.memory_space<vmem>>, vector<1x1x128xf32>
    %55 = vector.shape_cast %54 : vector<1x1x128xf32> to vector<1x128xf32>
    %56 = arith.subf %55, %11 : vector<1x128xf32>
    %57 = math.exp %56 : vector<1x128xf32>
    %58 = arith.addf %45, %57 : vector<1x128xf32>
    %c0_i32_29 = arith.constant 0 : i32
    %59 = vector.broadcast %c0_i32_29 : i32 to vector<1x128xi32>
    %60 = arith.cmpi eq, %0, %59 : vector<1x128xi32>
    %cst_30 = arith.constant 0.000000e+00 : f32
    %61 = vector.broadcast %cst_30 : f32 to vector<1x128xf32>
    %62 = arith.select %60, %55, %61 : vector<1x128xi1>, vector<1x128xf32>
    %63 = arith.addf %50, %62 : vector<1x128xf32>
    %64 = arith.cmpf oeq, %55, %11 : vector<1x128xf32>
    %c0_i32_31 = arith.constant 0 : i32
    %65 = vector.broadcast %c0_i32_31 : i32 to vector<1x128xi32>
    %66 = arith.select %64, %65, %53 : vector<1x128xi1>, vector<1x128xi32>
    %67 = math.log %58 : vector<1x128xf32>
    %68 = arith.addf %67, %11 : vector<1x128xf32>
    %69 = arith.subf %68, %63 : vector<1x128xf32>
    %70 = arith.cmpi eq, %66, %0 : vector<1x128xi32>
    %71 = arith.extui %70 : vector<1x128xi1> to vector<1x128xi32>
    %72 = arith.sitofp %71 : vector<1x128xi32> to vector<1x128xf32>
    %73 = tpu.iota {dimensions = array<i32: 0>} : vector<1x128xi32>
    %74 = tpu.iota {dimensions = array<i32: 1>} : vector<1x128xi32>
    %c128_i32 = arith.constant 128 : i32
    %75 = arith.muli %arg0, %c128_i32 : i32
    %c128_i32_32 = arith.constant 128 : i32
    %76 = vector.broadcast %c128_i32_32 : i32 to vector<1x128xi32>
    %77 = arith.muli %73, %76 : vector<1x128xi32>
    %78 = vector.broadcast %75 : i32 to vector<1x128xi32>
    %79 = arith.addi %78, %77 : vector<1x128xi32>
    %80 = arith.addi %79, %74 : vector<1x128xi32>
    %c8_i32 = arith.constant 8 : i32
    %81 = vector.broadcast %c8_i32 : i32 to vector<1x128xi32>
    %82 = arith.cmpi slt, %80, %81 : vector<1x128xi32>
    %cst_33 = arith.constant 0.000000e+00 : f32
    %83 = vector.broadcast %cst_33 : f32 to vector<1x128xf32>
    %84 = arith.select %82, %69, %83 : vector<1x128xi1>, vector<1x128xf32>
    %cst_34 = arith.constant 0.000000e+00 : f32
    %85 = vector.broadcast %cst_34 : f32 to vector<1x128xf32>
    %86 = arith.select %82, %72, %85 : vector<1x128xi1>, vector<1x128xf32>
    %cst_35 = arith.constant dense<0.000000e+00> : vector<128xf32>
    %87 = vector.multi_reduction <add>, %84, %cst_35 [0] : vector<1x128xf32> to vector<128xf32>
    %88 = vector.shape_cast %87 : vector<128xf32> to vector<1x128xf32>
    %c0_36 = arith.constant 0 : index
    %c0_37 = arith.constant 0 : index
    %89 = vector.load %arg3[%c0_36, %c0_37] : memref<1x128xf32, #tpu.memory_space<vmem>>, vector<1x128xf32>
    tpu.vector_store %arg3[%c0_36, %c0_37], %88 {strides = array<i32>} : memref<1x128xf32, #tpu.memory_space<vmem>>, vector<1x128xf32>,
    %cst_38 = arith.constant dense<0.000000e+00> : vector<128xf32>
    %90 = vector.multi_reduction <add>, %86, %cst_38 [0] : vector<1x128xf32> to vector<128xf32>
    %91 = vector.shape_cast %90 : vector<128xf32> to vector<1x128xf32>
    %c0_39 = arith.constant 0 : index
    %c0_40 = arith.constant 0 : index
    %92 = vector.load %arg4[%c0_39, %c0_40] : memref<1x128xf32, #tpu.memory_space<vmem>>, vector<1x128xf32>
    tpu.vector_store %arg4[%c0_39, %c0_40], %91 {strides = array<i32>} : memref<1x128xf32, #tpu.memory_space<vmem>>, vector<1x128xf32>,
    return
  }
  func.func @transform_0(%arg0: i32) -> (i32, i32, i32) {
    %c0_i32 = arith.constant 0 : i32
    %c0_i32_0 = arith.constant 0 : i32
    %c0_i32_1 = arith.constant 0 : i32
    return %c0_i32, %arg0, %c0_i32_0 : i32, i32, i32
  }
  func.func @transform_1(%arg0: i32) -> (i32, i32) {
    %c0_i32 = arith.constant 0 : i32
    %c0_i32_0 = arith.constant 0 : i32
    return %arg0, %c0_i32 : i32, i32
  }
  func.func @transform_2(%arg0: i32) -> (i32, i32) {
    %c0_i32 = arith.constant 0 : i32
    %c0_i32_0 = arith.constant 0 : i32
    return %c0_i32, %arg0 : i32, i32
  }
  func.func @transform_3(%arg0: i32) -> (i32, i32) {
    %c0_i32 = arith.constant 0 : i32
    %c0_i32_0 = arith.constant 0 : i32
    return %c0_i32, %arg0 : i32, i32
  }
}

</mosaic_0001>

<llo_original>
// kernel: tpu_custom_call.1
$region0: #{tpu_custom_call.1}
  #allocation0 [shape = 'u32[]', space=smem, size = 0x4, offset = 0x4, fixed_abs, tag = 'smem constant byte address 0x4 - core index']
  #allocation1 [shape = 'u32[144,128]{1,0:T(1,128)}', space=vmem, size = 0x12000, scoped, tag = 'internal scratch']
  %s0 = inlined_call_operand.hbm [shape: f32[4,1,128], index: 0, kind: input, shape index: {}]
  %s1 = inlined_call_operand.vmem [shape: s32[1,128], index: 1, kind: input, shape index: {}]
  %s2 = inlined_call_operand.hbm [shape: f32[1,128], index: 2, kind: output, shape index: {0}]
  %s3 = inlined_call_operand.hbm [shape: f32[1,128], index: 3, kind: output, shape index: {1}]
  %4 = xla_tuple %s2, %s3
  %s5 = sld [smem:[#allocation0]]
  $region30: #{tpu_custom_call.1} parent=0
    _
  %s7 = ssub.s32 1, %s5
  %s8 = scalar_select 0, %s7, %s5
  $region1: #{tpu_custom_call.1} parent=0
    #allocation2 [shape = 'u8[2048]{0}', space=vmem, size = 0x800, scoped, tag = 'input window, operand 0, single buffered']
    #allocation3 [shape = 's32[1]{0}', space=sflag, size = 0x4, scoped, tag = 'scoped memory for tpu_custom_call.1']
    #allocation4 [shape = 's32[1]{0}', space=sflag, size = 0x4, scoped, tag = 'scoped memory for tpu_custom_call.1']
    #allocation5 [shape = 'u8[512]{0}', space=vmem, size = 0x400, scoped, tag = 'output window, operand 0, single buffered']
    #allocation6 [shape = 'u8[512]{0}', space=vmem, size = 0x400, scoped, tag = 'output window, operand 1, single buffered']
    #allocation7 [shape = 's32[1]{0}', space=sflag, size = 0x4, scoped, tag = 'scoped memory for tpu_custom_call.1']
    %9 = vsyncpa [#allocation3], 0
    %10 = vsyncpa [#allocation4], 0
    %11 = vsyncpa [#allocation7], 0
    // Predicated region
    $region2: #{tpu_custom_call.1} parent=1 // pred_check
      _
    $region3: #{tpu_custom_call.1} parent=1 // pred_check_branch
      %13 = sbr.rel (0) target = $region5
    $region4: #{tpu_custom_call.1} parent=1 // pred_region
      %s15 = ssub.s32 64, 64
      %16 = vsyncadd [#allocation3], %s15
      %s17 = sshll.u32 [#allocation2], 4
      %s18 = int_to_ptr.vmem [resolvable:$true] %s17
      %23 = dma.hbm_to_vmem [thread:$0]  %s0, 64, %s18, [#allocation3], 16, 16, 1
    $region5: #{tpu_custom_call.1} parent=1 // pred_fallthru
      _
    // Predicated region
    $region6: #{tpu_custom_call.1} parent=1 // pred_check
      _
    $region7: #{tpu_custom_call.1} parent=1 // pred_check_branch
      %25 = sbr.rel (0) target = $region9
    $region8: #{tpu_custom_call.1} parent=1 // pred_region
      _
    $region9: #{tpu_custom_call.1} parent=1 // pred_fallthru
      _
    // Predicated region
    $region10: #{tpu_custom_call.1} parent=1 // pred_check
      _
    $region11: #{tpu_custom_call.1} parent=1 // pred_check_branch
      %27 = sbr.rel (0) target = $region13
    $region12: #{tpu_custom_call.1} parent=1 // pred_region
      %28 = dma.done [#allocation3], 64
    $region13: #{tpu_custom_call.1} parent=1 // pred_fallthru
      _
    %v29 = vld [vmem:[%s1] sm:$0x1]
    %v30 = vld [vmem:[#allocation2] sm:$0x1]
    %s31 = scalar_lea.vmem [#allocation2], 1
    %v32 = vld [vmem:[%s31] sm:$0x1]
    %v33 = vmax.f32 %v30, %v32
    %s34 = scalar_lea.vmem [#allocation2], 2
    %v35 = vld [vmem:[%s34] sm:$0x1]
    %v36 = vmax.f32 %v33, %v35
    %s37 = scalar_lea.vmem [#allocation2], 3
    %v38 = vld [vmem:[%s37] sm:$0x1]
    %v39 = vmax.f32 %v36, %v38
    %v40 = vsub.f32 %v38, %v39
    %v41 = vmul.f32 %v40, 1.442695
    %v42 = vpow.pop %v41
    %v43 = vadd.f32 %v42, 0.0
    %vm44 = vcmp.eq.s32.totalorder %v29, 3
    %v45 = vsel %vm44, %v38, 0.0
    %v46 = vadd.f32 %v45, 0.0
    %vm47 = vcmp.eq.f32.partialorder %v38, %v39
    %v48 = vsel %vm47, 3, 0
    %v49 = vsub.f32 %v35, %v39
    %v50 = vmul.f32 %v49, 1.442695
    %v51 = vpow.pop %v50
    %v52 = vadd.f32 %v43, %v51
    %vm53 = vcmp.eq.s32.totalorder %v29, 2
    %v54 = vsel %vm53, %v35, 0.0
    %v55 = vadd.f32 %v46, %v54
    %vm56 = vcmp.eq.f32.partialorder %v35, %v39
    %v57 = vsel %vm56, 2, %v48
    %v58 = vsub.f32 %v32, %v39
    %v59 = vmul.f32 %v58, 1.442695
    %v60 = vpow.pop %v59
    %v61 = vadd.f32 %v52, %v60
    %vm62 = vcmp.eq.s32.totalorder %v29, 1
    %v63 = vsel %vm62, %v32, 0.0
    %v64 = vadd.f32 %v55, %v63
    %vm65 = vcmp.eq.f32.partialorder %v32, %v39
    %v66 = vsel %vm65, 1, %v57
    %v67 = vsub.f32 %v30, %v39
    %v68 = vmul.f32 %v67, 1.442695
    %v69 = vpow.pop %v68
    %v70 = vadd.f32 %v61, %v69
    %vm71 = vcmp.eq.s32.totalorder %v29, 0
    %v72 = vsel %vm71, %v30, 0.0
    %v73 = vadd.f32 %v64, %v72
    %vm74 = vcmp.eq.f32.partialorder %v30, %v39
    %v75 = vsel %vm74, 0, %v66
    %v76 = vlog2.pop %v70
    %v77 = vmul.f32 %v76, 0.6931472
    %v78 = vadd.f32 %v77, %v39
    %v79 = vsub.f32 %v78, %v73
    %vm80 = vcmp.eq.s32.totalorder %v75, %v29
    %v81 = vsel %vm80, 1, 0
    %v82 = vcvt.s32.f32 %v81
    %v83 = vlaneseq
    %v84 = vshrl.u32 %v83, 7
    %v85 = vlaneseq
    %v86 = vand.u32 %v85, 127
    %s87 = smul.u32 0, 128
    %v88 = vmul.u32 %v84, 128
    %v89 = vstv %s87
    %v90 = vadd.s32 %v89, %v88
    %v91 = vadd.s32 %v90, %v86
    %vm92 = vcmp.lt.s32.totalorder %v91, 8
    %v93 = vsel %vm92, %v79, 0.0
    %v94 = vsel %vm92, %v82, 0.0
    %v95 = vadd.f32 %v93, 0.0
    %96 = vst [vmem:[#allocation5] sm:$0x1] %v95
    %v97 = vadd.f32 %v94, 0.0
    %98 = vst [vmem:[#allocation6] sm:$0x1] %v97
    // Predicated region
    $region14: #{tpu_custom_call.1} parent=1 // pred_check
      _
    $region15: #{tpu_custom_call.1} parent=1 // pred_check_branch
      %100 = sbr.rel (0) target = $region17
    $region16: #{tpu_custom_call.1} parent=1 // pred_region
      %s102 = ssub.s32 16, 16
      %103 = vsyncadd [#allocation4], %s102
      %s105 = sshll.u32 [#allocation5], 4
      %s106 = int_to_ptr.vmem [resolvable:$true] %s105
      %108 = dma.vmem_to_hbm [thread:$0]  %s106, 16, %s2, [#allocation4]
    $region17: #{tpu_custom_call.1} parent=1 // pred_fallthru
      _
    // Predicated region
    $region18: #{tpu_custom_call.1} parent=1 // pred_check
      _
    $region19: #{tpu_custom_call.1} parent=1 // pred_check_branch
      %110 = sbr.rel (0) target = $region21
    $region20: #{tpu_custom_call.1} parent=1 // pred_region
      %s112 = ssub.s32 16, 16
      %113 = vsyncadd [#allocation7], %s112
      %s115 = sshll.u32 [#allocation6], 4
      %s116 = int_to_ptr.vmem [resolvable:$true] %s115
      %118 = dma.vmem_to_hbm [thread:$0]  %s116, 16, %s3, [#allocation7]
    $region21: #{tpu_custom_call.1} parent=1 // pred_fallthru
      _
    // Predicated region
    $region22: #{tpu_custom_call.1} parent=1 // pred_check
      _
    $region23: #{tpu_custom_call.1} parent=1 // pred_check_branch
      %120 = sbr.rel (0) target = $region25
    $region24: #{tpu_custom_call.1} parent=1 // pred_region
      %121 = dma.done [#allocation4], 16
    $region25: #{tpu_custom_call.1} parent=1 // pred_fallthru
      _
    // Predicated region
    $region26: #{tpu_custom_call.1} parent=1 // pred_check
      _
    $region27: #{tpu_custom_call.1} parent=1 // pred_check_branch
      %123 = sbr.rel (0) target = $region29
    $region28: #{tpu_custom_call.1} parent=1 // pred_region
      %124 = dma.done [#allocation7], 16
    $region29: #{tpu_custom_call.1} parent=1 // pred_fallthru
      _
    %125 = vsyncpa [#allocation3], 1
    %126 = vsyncpa [#allocation4], 1
    %127 = vsyncpa [#allocation7], 1

</llo_original>
